<compile_context>
chip_gen: v5e
topology: v5e:2x2
jax: 0.10.0
libtpu: 0.0.40
codegen_flags: <defaults>
</compile_context>

<pallas_src>
import jax
import jax.numpy as jnp
from jax.experimental import pallas as pl
from jax.experimental.pallas import tpu as pltpu

_LANE = 128     # vreg lane width
_SUBLANE = 8    # vreg sublane depth (fp32)


def _swish_kernel(x_ref, o_ref):
    """Elementwise Swish on one lane-dense (block_rows, 128) tile."""
    xf = x_ref[...].astype(jnp.float32)
    # sigmoid(x) = 1 / (1 + exp(-x)); exp + divide go to the EUP.
    sig = 1.0 / (1.0 + jnp.exp(-xf))
    o_ref[...] = (xf * sig).astype(o_ref.dtype)


def swish_pallas(x, *, max_block_rows=1024):
    """Swish forward: x * sigmoid(x), any shape / float dtype."""
    orig_shape = x.shape
    dtype = x.dtype
    n = x.size
    flat = x.reshape(-1)

    # Lane-dense 2D layout: rows of 128 elements.
    rows = pl.cdiv(n, _LANE)

    # Grid: cap block size; otherwise prefer >=2 parallel blocks so both
    # TensorCores on v7x get work.  Tiny inputs use a single step.
    if rows > max_block_rows:
        grid = pl.cdiv(rows, max_block_rows)
    elif rows >= 2 * _SUBLANE:
        grid = 2
    else:
        grid = 1

    block_rows = pl.cdiv(rows, grid)
    block_rows = pl.cdiv(block_rows, _SUBLANE) * _SUBLANE   # sublane-aligned
    rows_padded = block_rows * grid

    pad = rows_padded * _LANE - n
    if pad:
        flat = jnp.pad(flat, (0, pad))
    x2 = flat.reshape(rows_padded, _LANE)

    out2 = pl.pallas_call(
        _swish_kernel,
        out_shape=jax.ShapeDtypeStruct((rows_padded, _LANE), dtype),
        grid_spec=pltpu.PrefetchScalarGridSpec(
            num_scalar_prefetch=0,
            grid=(grid,),
            in_specs=[pl.BlockSpec((block_rows, _LANE), lambda i: (i, 0))],
            out_specs=pl.BlockSpec((block_rows, _LANE), lambda i: (i, 0)),
        ),
        compiler_params=pltpu.CompilerParams(
            dimension_semantics=("parallel",)),
    )(x2)

    out = out2.reshape(-1)
    if pad:
        out = out[:n]
    return out.reshape(orig_shape)


def _reference_swish(x):
    """Plain-JAX reference mirroring the PyTorch forward."""
    return x * jax.nn.sigmoid(x)


if __name__ == "__main__":
    # Small shapes consistent with the module: batch=2, channels=4, spatial=16.
    N, C, H, W = 2, 4, 16, 16
    key = jax.random.PRNGKey(0)
    x = jax.random.normal(key, (N, C, H, W), dtype=jnp.float32)

    out = jax.block_until_ready(swish_pallas(x))
    ref = jax.block_until_ready(_reference_swish(x))

    assert out.shape == x.shape
    assert jnp.allclose(out, ref, atol=1e-5, rtol=1e-5), \
        f"max abs err {jnp.max(jnp.abs(out - ref))}"

    print("KERNEL_OK")
</pallas_src>

<mosaic_0001>
module attributes {stable_mosaic.version = 11 : i64} {
  func.func @_swish_kernel(%arg0: i32, %arg1: memref<8x128xf32, #tpu.memory_space<vmem>>, %arg2: memref<8x128xf32, #tpu.memory_space<vmem>>) attributes {dimension_semantics = [#tpu.dimension_semantics<parallel>], iteration_bounds = array<i64: 2>, scalar_prefetch = 0 : i64, scratch_operands = 0 : i64, tpu.core_type = #tpu.core_type<tc>, window_params = [{transform_indices = @transform_0, window_bounds = array<i64: 8, 128>}, {transform_indices = @transform_1, window_bounds = array<i64: 8, 128>}]} {
    %c0 = arith.constant 0 : index
    %c0_0 = arith.constant 0 : index
    %0 = vector.load %arg1[%c0, %c0_0] : memref<8x128xf32, #tpu.memory_space<vmem>>, vector<8x128xf32>
    %cst = arith.constant 0.000000e+00 : f32
    %1 = vector.broadcast %cst : f32 to vector<8x128xf32>
    %2 = arith.subf %1, %0 : vector<8x128xf32>
    %3 = math.exp %2 : vector<8x128xf32>
    %cst_1 = arith.constant 1.000000e+00 : f32
    %4 = vector.broadcast %cst_1 : f32 to vector<8x128xf32>
    %5 = arith.addf %4, %3 : vector<8x128xf32>
    %cst_2 = arith.constant 1.000000e+00 : f32
    %6 = vector.broadcast %cst_2 : f32 to vector<8x128xf32>
    %7 = arith.divf %6, %5 : vector<8x128xf32>
    %8 = arith.mulf %0, %7 : vector<8x128xf32>
    %c0_3 = arith.constant 0 : index
    %c0_4 = arith.constant 0 : index
    %9 = vector.load %arg2[%c0_3, %c0_4] : memref<8x128xf32, #tpu.memory_space<vmem>>, vector<8x128xf32>
    tpu.vector_store %arg2[%c0_3, %c0_4], %8 {strides = array<i32>} : memref<8x128xf32, #tpu.memory_space<vmem>>, vector<8x128xf32>,
    return
  }
  func.func @transform_0(%arg0: i32) -> (i32, i32) {
    %c0_i32 = arith.constant 0 : i32
    %c0_i32_0 = arith.constant 0 : i32
    return %arg0, %c0_i32 : i32, i32
  }
  func.func @transform_1(%arg0: i32) -> (i32, i32) {
    %c0_i32 = arith.constant 0 : i32
    %c0_i32_0 = arith.constant 0 : i32
    return %arg0, %c0_i32 : i32, i32
  }
}

</mosaic_0001>

<llo_original>
// kernel: tpu_custom_call.1
$region0: #{tpu_custom_call.1}
  #allocation0 [shape = 'u32[]', space=smem, size = 0x4, offset = 0x4, fixed_abs, tag = 'smem constant byte address 0x4 - core index']
  #allocation1 [shape = 'u32[72,128]{1,0:T(1,128)}', space=vmem, size = 0x9000, scoped, tag = 'internal scratch']
  %s0 = inlined_call_operand.hbm [shape: f32[16,128], index: 0, kind: input, shape index: {}]
  %s1 = inlined_call_operand.hbm [shape: f32[16,128], index: 1, kind: output, shape index: {}]
  %s2 = sld [smem:[#allocation0]]
  $region41: #{tpu_custom_call.1} parent=0
    _
  %s4 = ssub.s32 1, %s2
  %s5 = scalar_select 0, %s4, %s2
  $region1: #{tpu_custom_call.1} parent=0
    #allocation2 [shape = 'u8[8192]{0}', space=vmem, size = 0x2000, scoped, tag = 'input window, operand 0']
    #allocation3 [shape = 's32[2]{0}', space=sflag, size = 0x8, scoped, tag = 'scoped memory for tpu_custom_call.1']
    #allocation4 [shape = 's32[2]{0}', space=sflag, size = 0x8, scoped, tag = 'scoped memory for tpu_custom_call.1']
    #allocation5 [shape = 'u8[8192]{0}', space=vmem, size = 0x2000, scoped, tag = 'output window, operand 0']
    %6 = vsyncpa [#allocation3], 0
    %s7 = scalar_lea.sflag [#allocation3], 1
    %8 = vsyncpa %s7, 0
    %9 = vsyncpa [#allocation4], 0
    %s10 = scalar_lea.sflag [#allocation4], 1
    %11 = vsyncpa %s10, 0
    loop: start=0, step=1, limit=4
    $region2: #{tpu_custom_call.1} parent=1 // loop_pre_header
      _
    $region3: #{tpu_custom_call.1} parent=1 // loop_header
      %s13 = sphi 0, %s17
      %p14 = scmp.ge.s32.totalorder %s13, 4
      %s23 = sphi 0, %s25
      %s26 = sphi 0, %s23
      %s27 = sphi 0, %s26
      %s43 = sphi 0, %s27
      %s49 = sphi 0, %s51
      %s52 = sphi 0, %s49
      %s53 = sphi 0, %s52
      %s69 = sphi 0, %s53
    $region4: #{tpu_custom_call.1} parent=1 // loop_header_branch
      %16 = sbr.rel (%p14) target = $region8
    $region5: #{tpu_custom_call.1} parent=1 // loop_body
      %s18 = ssub.s32 %s13, 1
      %s19 = ssub.s32 %s13, 2
      %s20 = sadd.s32 %s13, 1
      %s21 = ssub.s32 %s13, %s20
      %p22 = scmp.eq.s32.totalorder %s21, 0
      %s24 = sadd.s32 %s23, 1
      %s25 = scalar_select %p22, %s23, %s24
      %p28 = pneg %p22
      %p29 = scmp.eq.s32.totalorder %s13, 1
      %p30 = por %p28, %p29
      %p31 = scmp.ne.s32.totalorder %s23, %s26
      %p32 = scmp.eq.s32.totalorder %s13, 0
      %p33 = por %p31, %p32
      %p34 = scmp.ne.s32.totalorder %s23, %s26
      %p35 = scmp.eq.s32.totalorder %s18, 1
      %p36 = por %p34, %p35
      %p37 = scmp.ne.s32.totalorder %s26, %s27
      %p38 = scmp.eq.s32.totalorder %s18, 0
      %p39 = por %p37, %p38
      %p40 = scmp.ne.s32.totalorder %s26, %s27
      %p41 = scmp.eq.s32.totalorder %s19, 1
      %p42 = por %p40, %p41
      %p44 = scmp.ne.s32.totalorder %s27, %s43
      %p45 = scmp.eq.s32.totalorder %s19, 0
      %p46 = por %p44, %p45
      %s47 = ssub.s32 %s13, %s20
      %p48 = scmp.eq.s32.totalorder %s47, 0
      %s50 = sadd.s32 %s49, 1
      %s51 = scalar_select %p48, %s49, %s50
      %p54 = pneg %p48
      %p55 = scmp.eq.s32.totalorder %s13, 1
      %p56 = por %p54, %p55
      %p57 = scmp.ne.s32.totalorder %s49, %s52
      %p58 = scmp.eq.s32.totalorder %s13, 0
      %p59 = por %p57, %p58
      %p60 = scmp.ne.s32.totalorder %s49, %s52
      %p61 = scmp.eq.s32.totalorder %s18, 1
      %p62 = por %p60, %p61
      %p63 = scmp.ne.s32.totalorder %s52, %s53
      %p64 = scmp.eq.s32.totalorder %s18, 0
      %p65 = por %p63, %p64
      %p66 = scmp.ne.s32.totalorder %s52, %s53
      %p67 = scmp.eq.s32.totalorder %s19, 1
      %p68 = por %p66, %p67
      %p70 = scmp.ne.s32.totalorder %s53, %s69
      %p71 = scmp.eq.s32.totalorder %s19, 0
      %p72 = por %p70, %p71
      %p73 = scmp.le.s32.totalorder 1, %s13
      %p74 = scmp.lt.s32.totalorder %s13, 3
      %p75 = pnand %p73, %p74
      %p76 = pneg %p75
      // Predicated region
      $region9: #{tpu_custom_call.1} parent=5 // pred_check
        _
      $region10: #{tpu_custom_call.1} parent=5 // pred_check_branch
        %78 = sbr.rel (%p75) target = $region12
      $region11: #{tpu_custom_call.1} parent=5 // pred_region
        %s79 = ssub.s32 %s13, 1
      $region12: #{tpu_custom_call.1} parent=5 // pred_fallthru
        _
      %p80 = scmp.lt.s32.totalorder %s13, 2
      // Predicated region
      $region13: #{tpu_custom_call.1} parent=5 // pred_check
        %p81 = pneg %p80
      $region14: #{tpu_custom_call.1} parent=5 // pred_check_branch
        %83 = sbr.rel (%p81) target = $region16
      $region15: #{tpu_custom_call.1} parent=5 // pred_region
        // Predicated region
        $region17: #{tpu_custom_call.1} parent=15 // pred_check
          %p84 = pneg %p33
        $region18: #{tpu_custom_call.1} parent=15 // pred_check_branch
          %86 = sbr.rel (%p84) target = $region20
        $region19: #{tpu_custom_call.1} parent=15 // pred_region
          %s87 = sand.u32 %s23, 1
          %s88 = scalar_lea.sflag [#allocation3], %s87
          %s89 = sand.u32 %s23, 1
          %s90 = smul.addr %s89, 8
          %s91 = scalar_lea.vmem [#allocation2], %s90
          %93 = vsyncadd %s88, 0
          %s94 = smul.addr %s13, 8
          %s95 = scalar_lea.hbm %s0, %s94
          %s97 = sshll.u32 %s95, 4
          %s98 = int_to_ptr.hbm [resolvable:$true] %s97
          %s99 = sshll.u32 %s91, 4
          %s100 = int_to_ptr.vmem [resolvable:$true] %s99
          %102 = dma.hbm_to_vmem [thread:$0]  %s98, 128, %s100, %s88
        $region20: #{tpu_custom_call.1} parent=15 // pred_fallthru
          _
      $region16: #{tpu_custom_call.1} parent=5 // pred_fallthru
        _
      %p103 = scmp.le.s32.totalorder 1, %s13
      %p104 = scmp.lt.s32.totalorder %s13, 3
      %p105 = pnand %p103, %p104
      %p106 = pneg %p105
      // Predicated region
      $region21: #{tpu_custom_call.1} parent=5 // pred_check
        _
      $region22: #{tpu_custom_call.1} parent=5 // pred_check_branch
        %108 = sbr.rel (%p105) target = $region24
      $region23: #{tpu_custom_call.1} parent=5 // pred_region
        %s109 = ssub.s32 %s13, 1
        %s110 = sand.u32 %s26, 1
        %s111 = scalar_lea.sflag [#allocation3], %s110
        %s112 = sand.u32 %s26, 1
        %s113 = smul.addr %s112, 8
        %s114 = scalar_lea.vmem [#allocation2], %s113
        // Predicated region
        $region25: #{tpu_custom_call.1} parent=23 // pred_check
          %p115 = pneg %p39
        $region26: #{tpu_custom_call.1} parent=23 // pred_check_branch
          %117 = sbr.rel (%p115) target = $region28
        $region27: #{tpu_custom_call.1} parent=23 // pred_region
          %119 = dma.done %s111, 128
        $region28: #{tpu_custom_call.1} parent=23 // pred_fallthru
          _
        %s120 = sand.u32 %s26, 1
        %s121 = scalar_lea.sflag [#allocation3], %s120
        %s122 = sand.u32 %s26, 1
        %s123 = smul.addr %s122, 8
        %s124 = scalar_lea.vmem [#allocation2], %s123
        %p125 = pneg %p39
        %p126 = pneg %p36
        %p127 = pneg %p65
        %p128 = pneg %p62
        %s129 = sand.u32 %s52, 1
        %s130 = scalar_lea.sflag [#allocation4], %s129
        %s131 = sand.u32 %s52, 1
        %s132 = smul.addr %s131, 8
        %s133 = scalar_lea.vmem [#allocation5], %s132
        %v134 = vld [vmem:[%s114] sm:$0xff]
        %v135 = vsub.f32 0.0, %v134
        %v136 = vmul.f32 %v135, 1.442695
        %v137 = vpow.pop %v136
        %v138 = vadd.f32 %v137, 1.0
        %v139 = vrcp.pop %v138
        %v140 = vmul.f32 %v138, %v139
        %v141 = vsub.f32 1.0, %v140
        %v142 = vmul.f32 %v139, %v141
        %v143 = vadd.f32 %v139, %v142
        %vm144 = vweird.f32 %v138
        %vm145 = vweird.f32 %v139
        %vm146 = vmor %vm144, %vm145
        %v147 = vsel %vm146, %v139, %v143
        %v148 = vand.u32 2147483647, %v138
        %vm149 = vcmp.eq.f32.partialorder %v148, 8.507059e+37
        %v150 = vand.u32 %v138, 2147483648
        %v151 = vor.u32 1.1754944e-38, %v150
        %v152 = vsel %vm149, %v151, %v147
        %v153 = vmul.f32 1.0, %v152
        %v154 = vmul.f32 %v134, %v153
        %155 = vst [vmem:[%s133] sm:$0xff] %v154
        %s156 = sand.u32 %s52, 1
        %s157 = scalar_lea.sflag [#allocation4], %s156
        %s158 = sand.u32 %s52, 1
        %s159 = smul.addr %s158, 8
        %s160 = scalar_lea.vmem [#allocation5], %s159
        // Predicated region
        $region29: #{tpu_custom_call.1} parent=23 // pred_check
          %p161 = pneg %p62
        $region30: #{tpu_custom_call.1} parent=23 // pred_check_branch
          %163 = sbr.rel (%p161) target = $region32
        $region31: #{tpu_custom_call.1} parent=23 // pred_region
          %165 = vsyncadd %s157, 0
          %s166 = smul.addr %s18, 8
          %s167 = scalar_lea.hbm %s1, %s166
          %s169 = sshll.u32 %s160, 4
          %s170 = int_to_ptr.vmem [resolvable:$true] %s169
          %s171 = sshll.u32 %s167, 4
          %s172 = int_to_ptr.hbm [resolvable:$true] %s171
          %174 = dma.vmem_to_hbm [thread:$0]  %s170, 128, %s172, %s157
        $region32: #{tpu_custom_call.1} parent=23 // pred_fallthru
          _
      $region24: #{tpu_custom_call.1} parent=5 // pred_fallthru
        _
      %p175 = scmp.le.s32.totalorder 2, %s13
      // Predicated region
      $region33: #{tpu_custom_call.1} parent=5 // pred_check
        %p176 = pneg %p175
      $region34: #{tpu_custom_call.1} parent=5 // pred_check_branch
        %178 = sbr.rel (%p176) target = $region36
      $region35: #{tpu_custom_call.1} parent=5 // pred_region
        %s179 = ssub.s32 %s13, 2
        // Predicated region
        $region37: #{tpu_custom_call.1} parent=35 // pred_check
          %p180 = pneg %p68
        $region38: #{tpu_custom_call.1} parent=35 // pred_check_branch
          %182 = sbr.rel (%p180) target = $region40
        $region39: #{tpu_custom_call.1} parent=35 // pred_region
          %s183 = sand.u32 %s53, 1
          %s184 = scalar_lea.sflag [#allocation4], %s183
          %s185 = sand.u32 %s53, 1
          %s186 = smul.addr %s185, 8
          %s187 = scalar_lea.vmem [#allocation5], %s186
          %189 = dma.done %s184, 128
        $region40: #{tpu_custom_call.1} parent=35 // pred_fallthru
          _
      $region36: #{tpu_custom_call.1} parent=5 // pred_fallthru
        _
    $region6: #{tpu_custom_call.1} parent=1 // loop_footer
      %s17 = sadd.s32 1, %s13
    $region7: #{tpu_custom_call.1} parent=1 // loop_footer_branch
      %12 = sbr.rel target = $region3
    $region8: #{tpu_custom_call.1} parent=1 // loop_exit
      _
    %190 = vsyncpa [#allocation3], 1
    %s191 = scalar_lea.sflag [#allocation3], 1
    %192 = vsyncpa %s191, 1
    %193 = vsyncpa [#allocation4], 1
    %s194 = scalar_lea.sflag [#allocation4], 1
    %195 = vsyncpa %s194, 1

</llo_original>
